<compile_context>
chip_gen: v7x
topology: tpu7x:2x2x1
jax: 0.10.0
libtpu: 0.0.40
codegen_flags: <defaults>
</compile_context>

<pallas_src>
import jax
import jax.numpy as jnp
from jax import lax
from jax.experimental import pallas as pl
from jax.experimental.pallas import tpu as pltpu


def decoder_lstm_kernel(x_ref, h0_ref, c0_ref, wih_ref, whh_ref, b_ref,
                        y_ref, hn_ref, cn_ref, gx_ref):
    """relu(x) + LSTM recurrence, everything resident in VMEM.

    x_ref   : (T*B, I)   input sequence, flattened over (time, batch)
    h0_ref  : (1, B, H)  initial hidden
    c0_ref  : (1, B, H)  initial cell ("context")
    wih_ref : (I, 4H)    W_ih^T  (PyTorch gate order i, f, g, o)
    whh_ref : (H, 4H)    W_hh^T, single lane-dense buffer (4H = 128 lanes)
    b_ref   : (1, 4H)    b_ih + b_hh
    y_ref   : (T, B, H)  per-step hidden outputs
    hn_ref  : (1, B, H)  final hidden
    cn_ref  : (1, B, H)  final cell
    gx_ref  : (T*B, 4H)  f32 scratch: precomputed input projections (lane-dense)
    """
    T, B, H = y_ref.shape

    # ---- Hoisted input projection: one big MXU matmul, off the serial path ----
    xr = jnp.maximum(x_ref[...], 0.0)                       # F.relu(x)
    gx_ref[...] = (jnp.dot(xr, wih_ref[...], preferred_element_type=jnp.float32)
                   + b_ref[...])                            # (T*B, 4H)

    # ---- Hoist recurrent weights out of the loop (live in vregs throughout) ----
    whh = whh_ref[...]                                      # (H, 4H)

    # Per-lane activation constants (hoisted out of the loop):
    #   i/f/o lanes: sigmoid(x) = 0.5 * tanh(0.5 x) + 0.5   (scale=0.5, shift=0.5)
    #   g lanes    : tanh(x)                                 (scale=1.0, shift=0.0)
    lane = lax.broadcasted_iota(jnp.int32, (1, 4 * H), 1)
    is_g = (lane >= 2 * H) & (lane < 3 * H)
    scale = jnp.where(is_g, 1.0, 0.5).astype(jnp.float32)
    shift = jnp.where(is_g, 0.0, 0.5).astype(jnp.float32)

    def step(t, carry):
        h, c = carry
        # One fused (B,H) x (H,4H) recurrent matmul: single vmatmul push/pop on
        # the serial h-chain.  gx slice is lane-dense (4H = 128) -> unmasked vld.
        gates = gx_ref[pl.ds(t * B, B), :] + jnp.dot(
            h, whh, preferred_element_type=jnp.float32)     # (B, 4H)
        # One 128-lane EUP push for all four gate activations.
        act = scale * jnp.tanh(scale * gates) + shift       # (B, 4H)
        i_g = act[:, 0 * H:1 * H]
        f_g = act[:, 1 * H:2 * H]
        g_g = act[:, 2 * H:3 * H]
        o_g = act[:, 3 * H:4 * H]
        c_new = f_g * c + i_g * g_g
        h_new = o_g * jnp.tanh(c_new)
        # H=32-lane store is masked but off the h/c dependence chain; with the
        # unrolled loop it overlaps the next step's matmul.
        y_ref[t] = h_new
        return h_new, c_new

    # h/c ride the loop carry (vregs) -- no per-step VMEM round trip.
    # T is small here; switch to a bounded unroll (e.g. 8) for long sequences.
    h_fin, c_fin = lax.fori_loop(0, T, step, (h0_ref[0], c0_ref[0]),
                                 unroll=True)

    hn_ref[0] = h_fin
    cn_ref[0] = c_fin


def decoder_rnn_forward(x, hidden, context, w_ih, w_hh, b_ih, b_hh):
    """Wrapper: parameter reshaping in plain JAX, everything else in the kernel."""
    seq_len, batch, input_size = x.shape
    H = w_hh.shape[1]

    x_flat = x.reshape(seq_len * batch, input_size).astype(jnp.float32)
    wih_t = jnp.asarray(w_ih.T, jnp.float32)                 # (I, 4H)
    whh_t = jnp.asarray(w_hh.T, jnp.float32)                 # (H, 4H) lane-dense
    bias = (b_ih + b_hh).reshape(1, 4 * H).astype(jnp.float32)

    vmem = pl.BlockSpec(memory_space=pltpu.MemorySpace.VMEM)
    out_shapes = (
        jax.ShapeDtypeStruct((seq_len, batch, H), jnp.float32),
        jax.ShapeDtypeStruct((1, batch, H), jnp.float32),
        jax.ShapeDtypeStruct((1, batch, H), jnp.float32),
    )

    y, h_n, c_n = pl.pallas_call(
        decoder_lstm_kernel,
        out_shape=out_shapes,
        in_specs=[vmem] * 6,
        out_specs=(vmem, vmem, vmem),
        scratch_shapes=[pltpu.VMEM((seq_len * batch, 4 * H), jnp.float32)],
    )(x_flat, hidden, context, wih_t, whh_t, bias)

    return y, (h_n, c_n)


def decoder_rnn_reference(x, hidden, context, w_ih, w_hh, b_ih, b_hh):
    """Pure-JAX reference mimicking F.relu + nn.LSTM (1 layer, unidirectional)."""
    H = w_hh.shape[1]
    x = jnp.maximum(x, 0.0)
    h = hidden[0]
    c = context[0]

    def step(carry, xt):
        h, c = carry
        gates = xt @ w_ih.T + b_ih + h @ w_hh.T + b_hh
        i_g = jax.nn.sigmoid(gates[:, 0 * H:1 * H])
        f_g = jax.nn.sigmoid(gates[:, 1 * H:2 * H])
        g_g = jnp.tanh(gates[:, 2 * H:3 * H])
        o_g = jax.nn.sigmoid(gates[:, 3 * H:4 * H])
        c_new = f_g * c + i_g * g_g
        h_new = o_g * jnp.tanh(c_new)
        return (h_new, c_new), h_new

    (h_fin, c_fin), ys = lax.scan(step, (h, c), x)
    return ys, (h_fin[None], c_fin[None])


if __name__ == "__main__":
    # Small shapes: seq=8, batch=2, input_size=16, hidden_size=32, 1 layer, unidir.
    SEQ, B, I, H = 8, 2, 16, 32

    key = jax.random.PRNGKey(0)
    k = jax.random.split(key, 8)
    scale = 1.0 / jnp.sqrt(H)

    x = jax.random.normal(k[0], (SEQ, B, I), jnp.float32)
    hidden = jax.random.normal(k[1], (1, B, H), jnp.float32)
    context = jax.random.normal(k[2], (1, B, H), jnp.float32)

    # PyTorch LSTM parameter shapes (gate order i, f, g, o), deterministic init.
    w_ih = jax.random.uniform(k[3], (4 * H, I), jnp.float32, -scale, scale)
    w_hh = jax.random.uniform(k[4], (4 * H, H), jnp.float32, -scale, scale)
    b_ih = jax.random.uniform(k[5], (4 * H,), jnp.float32, -scale, scale)
    b_hh = jax.random.uniform(k[6], (4 * H,), jnp.float32, -scale, scale)

    fwd = jax.jit(decoder_rnn_forward)
    y, (h_n, c_n) = fwd(x, hidden, context, w_ih, w_hh, b_ih, b_hh)
    jax.block_until_ready((y, h_n, c_n))

    # Correctness check against a pure-JAX reference (tanh-form sigmoid and
    # reassociated bias add cause only ulp-level deviations).
    y_ref, (h_ref, c_ref) = decoder_rnn_reference(
        x, hidden, context, w_ih, w_hh, b_ih, b_hh)
    assert jnp.allclose(y, y_ref, atol=2e-5, rtol=1e-5)
    assert jnp.allclose(h_n, h_ref, atol=2e-5, rtol=1e-5)
    assert jnp.allclose(c_n, c_ref, atol=2e-5, rtol=1e-5)

    print("KERNEL_OK")
</pallas_src>

<mosaic_0001>
module attributes {stable_mosaic.version = 11 : i64} {
  func.func @decoder_lstm_kernel(%arg0: memref<16x16xf32, #tpu.memory_space<vmem>>, %arg1: memref<1x2x32xf32, #tpu.memory_space<vmem>>, %arg2: memref<1x2x32xf32, #tpu.memory_space<vmem>>, %arg3: memref<16x128xf32, #tpu.memory_space<vmem>>, %arg4: memref<32x128xf32, #tpu.memory_space<vmem>>, %arg5: memref<1x128xf32, #tpu.memory_space<vmem>>, %arg6: memref<8x2x32xf32, #tpu.memory_space<vmem>>, %arg7: memref<1x2x32xf32, #tpu.memory_space<vmem>>, %arg8: memref<1x2x32xf32, #tpu.memory_space<vmem>>, %arg9: memref<16x128xf32, #tpu.memory_space<vmem>>) attributes {dimension_semantics = [], scalar_prefetch = 0 : i64, scratch_operands = 1 : i64, tpu.core_type = #tpu.core_type<tc>} {
    %c0 = arith.constant 0 : index
    %c0_0 = arith.constant 0 : index
    %0 = vector.load %arg0[%c0, %c0_0] : memref<16x16xf32, #tpu.memory_space<vmem>>, vector<16x16xf32>
    %cst = arith.constant 0.000000e+00 : f32
    %1 = vector.broadcast %cst : f32 to vector<16x16xf32>
    %2 = arith.maximumf %0, %1 : vector<16x16xf32>
    %c0_1 = arith.constant 0 : index
    %c0_2 = arith.constant 0 : index
    %3 = vector.load %arg3[%c0_1, %c0_2] : memref<16x128xf32, #tpu.memory_space<vmem>>, vector<16x128xf32>
    %cst_3 = arith.constant dense<0.000000e+00> : vector<16x128xf32>
    %4 = tpu.matmul %2, %3, %cst_3 {dimension_numbers = #tpu.dot_dimension_numbers<[1], [0], [0], [1], [0, 0, 1, 1], [], []>} : vector<16x16xf32>, vector<16x128xf32>, vector<16x128xf32> -> vector<16x128xf32>
    %c0_4 = arith.constant 0 : index
    %c0_5 = arith.constant 0 : index
    %5 = vector.load %arg5[%c0_4, %c0_5] : memref<1x128xf32, #tpu.memory_space<vmem>>, vector<1x128xf32>
    %6 = vector.broadcast %5 : vector<1x128xf32> to vector<16x128xf32>
    %7 = arith.addf %4, %6 : vector<16x128xf32>
    %c0_6 = arith.constant 0 : index
    %c0_7 = arith.constant 0 : index
    %8 = vector.load %arg9[%c0_6, %c0_7] : memref<16x128xf32, #tpu.memory_space<vmem>>, vector<16x128xf32>
    tpu.vector_store %arg9[%c0_6, %c0_7], %7 {strides = array<i32>} : memref<16x128xf32, #tpu.memory_space<vmem>>, vector<16x128xf32>,
    %c0_8 = arith.constant 0 : index
    %c0_9 = arith.constant 0 : index
    %9 = vector.load %arg4[%c0_8, %c0_9] : memref<32x128xf32, #tpu.memory_space<vmem>>, vector<32x128xf32>
    %10 = tpu.iota {dimensions = array<i32: 1>} : vector<1x128xi32>
    %c64_i32 = arith.constant 64 : i32
    %11 = vector.broadcast %c64_i32 : i32 to vector<1x128xi32>
    %12 = arith.cmpi sge, %10, %11 : vector<1x128xi32>
    %c96_i32 = arith.constant 96 : i32
    %13 = vector.broadcast %c96_i32 : i32 to vector<1x128xi32>
    %14 = arith.cmpi slt, %10, %13 : vector<1x128xi32>
    %15 = arith.andi %12, %14 : vector<1x128xi1>
    %cst_10 = arith.constant 1.000000e+00 : f32
    %cst_11 = arith.constant 5.000000e-01 : f32
    %16 = vector.broadcast %cst_10 : f32 to vector<1x128xf32>
    %17 = vector.broadcast %cst_11 : f32 to vector<1x128xf32>
    %18 = arith.select %15, %16, %17 : vector<1x128xi1>, vector<1x128xf32>
    %cst_12 = arith.constant 0.000000e+00 : f32
    %cst_13 = arith.constant 5.000000e-01 : f32
    %19 = vector.broadcast %cst_12 : f32 to vector<1x128xf32>
    %20 = vector.broadcast %cst_13 : f32 to vector<1x128xf32>
    %21 = arith.select %15, %19, %20 : vector<1x128xi1>, vector<1x128xf32>
    %c0_14 = arith.constant 0 : index
    %c0_15 = arith.constant 0 : index
    %c0_16 = arith.constant 0 : index
    %22 = vector.load %arg1[%c0_14, %c0_15, %c0_16] : memref<1x2x32xf32, #tpu.memory_space<vmem>>, vector<1x2x32xf32>
    %23 = vector.shape_cast %22 : vector<1x2x32xf32> to vector<2x32xf32>
    %c0_17 = arith.constant 0 : index
    %c0_18 = arith.constant 0 : index
    %c0_19 = arith.constant 0 : index
    %24 = vector.load %arg2[%c0_17, %c0_18, %c0_19] : memref<1x2x32xf32, #tpu.memory_space<vmem>>, vector<1x2x32xf32>
    %25 = vector.shape_cast %24 : vector<1x2x32xf32> to vector<2x32xf32>
    %c0_i32 = arith.constant 0 : i32
    %c2_i32 = arith.constant 2 : i32
    %26 = arith.muli %c0_i32, %c2_i32 : i32
    %27 = arith.index_cast %26 : i32 to index
    %c0_20 = arith.constant 0 : index
    %28 = vector.load %arg9[%27, %c0_20] : memref<16x128xf32, #tpu.memory_space<vmem>>, vector<2x128xf32>
    %cst_21 = arith.constant dense<0.000000e+00> : vector<2x128xf32>
    %29 = tpu.matmul %23, %9, %cst_21 {dimension_numbers = #tpu.dot_dimension_numbers<[1], [0], [0], [1], [0, 0, 1, 1], [], []>} : vector<2x32xf32>, vector<32x128xf32>, vector<2x128xf32> -> vector<2x128xf32>
    %30 = arith.addf %28, %29 : vector<2x128xf32>
    %31 = vector.broadcast %18 : vector<1x128xf32> to vector<2x128xf32>
    %32 = arith.mulf %31, %30 : vector<2x128xf32>
    %33 = math.tanh %32 : vector<2x128xf32>
    %34 = vector.broadcast %18 : vector<1x128xf32> to vector<2x128xf32>
    %35 = arith.mulf %34, %33 : vector<2x128xf32>
    %36 = vector.broadcast %21 : vector<1x128xf32> to vector<2x128xf32>
    %37 = arith.addf %35, %36 : vector<2x128xf32>
    %38 = vector.extract_strided_slice %37 {offsets = [0, 0], sizes = [2, 32], strides = [1, 1]} : vector<2x128xf32> to vector<2x32xf32>
    %39 = vector.extract_strided_slice %37 {offsets = [0, 32], sizes = [2, 32], strides = [1, 1]} : vector<2x128xf32> to vector<2x32xf32>
    %40 = vector.extract_strided_slice %37 {offsets = [0, 64], sizes = [2, 32], strides = [1, 1]} : vector<2x128xf32> to vector<2x32xf32>
    %41 = vector.extract_strided_slice %37 {offsets = [0, 96], sizes = [2, 32], strides = [1, 1]} : vector<2x128xf32> to vector<2x32xf32>
    %42 = arith.mulf %39, %25 : vector<2x32xf32>
    %43 = arith.mulf %38, %40 : vector<2x32xf32>
    %44 = arith.addf %42, %43 : vector<2x32xf32>
    %45 = math.tanh %44 : vector<2x32xf32>
    %46 = arith.mulf %41, %45 : vector<2x32xf32>
    %47 = arith.index_cast %c0_i32 : i32 to index
    %c0_22 = arith.constant 0 : index
    %c0_23 = arith.constant 0 : index
    %48 = vector.load %arg6[%47, %c0_22, %c0_23] : memref<8x2x32xf32, #tpu.memory_space<vmem>>, vector<1x2x32xf32>
    %49 = vector.shape_cast %48 : vector<1x2x32xf32> to vector<2x32xf32>
    %50 = vector.shape_cast %46 : vector<2x32xf32> to vector<1x2x32xf32>
    tpu.vector_store %arg6[%47, %c0_22, %c0_23], %50 {strides = array<i32>} : memref<8x2x32xf32, #tpu.memory_space<vmem>>, vector<1x2x32xf32>,
    %c1_i32 = arith.constant 1 : i32
    %c2_i32_24 = arith.constant 2 : i32
    %51 = arith.muli %c1_i32, %c2_i32_24 : i32
    %52 = arith.index_cast %51 : i32 to index
    %c0_25 = arith.constant 0 : index
    %53 = vector.load %arg9[%52, %c0_25] : memref<16x128xf32, #tpu.memory_space<vmem>>, vector<2x128xf32>
    %cst_26 = arith.constant dense<0.000000e+00> : vector<2x128xf32>
    %54 = tpu.matmul %46, %9, %cst_26 {dimension_numbers = #tpu.dot_dimension_numbers<[1], [0], [0], [1], [0, 0, 1, 1], [], []>} : vector<2x32xf32>, vector<32x128xf32>, vector<2x128xf32> -> vector<2x128xf32>
    %55 = arith.addf %53, %54 : vector<2x128xf32>
    %56 = vector.broadcast %18 : vector<1x128xf32> to vector<2x128xf32>
    %57 = arith.mulf %56, %55 : vector<2x128xf32>
    %58 = math.tanh %57 : vector<2x128xf32>
    %59 = vector.broadcast %18 : vector<1x128xf32> to vector<2x128xf32>
    %60 = arith.mulf %59, %58 : vector<2x128xf32>
    %61 = vector.broadcast %21 : vector<1x128xf32> to vector<2x128xf32>
    %62 = arith.addf %60, %61 : vector<2x128xf32>
    %63 = vector.extract_strided_slice %62 {offsets = [0, 0], sizes = [2, 32], strides = [1, 1]} : vector<2x128xf32> to vector<2x32xf32>
    %64 = vector.extract_strided_slice %62 {offsets = [0, 32], sizes = [2, 32], strides = [1, 1]} : vector<2x128xf32> to vector<2x32xf32>
    %65 = vector.extract_strided_slice %62 {offsets = [0, 64], sizes = [2, 32], strides = [1, 1]} : vector<2x128xf32> to vector<2x32xf32>
    %66 = vector.extract_strided_slice %62 {offsets = [0, 96], sizes = [2, 32], strides = [1, 1]} : vector<2x128xf32> to vector<2x32xf32>
    %67 = arith.mulf %64, %44 : vector<2x32xf32>
    %68 = arith.mulf %63, %65 : vector<2x32xf32>
    %69 = arith.addf %67, %68 : vector<2x32xf32>
    %70 = math.tanh %69 : vector<2x32xf32>
    %71 = arith.mulf %66, %70 : vector<2x32xf32>
    %72 = arith.index_cast %c1_i32 : i32 to index
    %c0_27 = arith.constant 0 : index
    %c0_28 = arith.constant 0 : index
    %73 = vector.load %arg6[%72, %c0_27, %c0_28] : memref<8x2x32xf32, #tpu.memory_space<vmem>>, vector<1x2x32xf32>
    %74 = vector.shape_cast %73 : vector<1x2x32xf32> to vector<2x32xf32>
    %75 = vector.shape_cast %71 : vector<2x32xf32> to vector<1x2x32xf32>
    tpu.vector_store %arg6[%72, %c0_27, %c0_28], %75 {strides = array<i32>} : memref<8x2x32xf32, #tpu.memory_space<vmem>>, vector<1x2x32xf32>,
    %c2_i32_29 = arith.constant 2 : i32
    %c2_i32_30 = arith.constant 2 : i32
    %76 = arith.muli %c2_i32_29, %c2_i32_30 : i32
    %77 = arith.index_cast %76 : i32 to index
    %c0_31 = arith.constant 0 : index
    %78 = vector.load %arg9[%77, %c0_31] : memref<16x128xf32, #tpu.memory_space<vmem>>, vector<2x128xf32>
    %cst_32 = arith.constant dense<0.000000e+00> : vector<2x128xf32>
    %79 = tpu.matmul %71, %9, %cst_32 {dimension_numbers = #tpu.dot_dimension_numbers<[1], [0], [0], [1], [0, 0, 1, 1], [], []>} : vector<2x32xf32>, vector<32x128xf32>, vector<2x128xf32> -> vector<2x128xf32>
    %80 = arith.addf %78, %79 : vector<2x128xf32>
    %81 = vector.broadcast %18 : vector<1x128xf32> to vector<2x128xf32>
    %82 = arith.mulf %81, %80 : vector<2x128xf32>
    %83 = math.tanh %82 : vector<2x128xf32>
    %84 = vector.broadcast %18 : vector<1x128xf32> to vector<2x128xf32>
    %85 = arith.mulf %84, %83 : vector<2x128xf32>
    %86 = vector.broadcast %21 : vector<1x128xf32> to vector<2x128xf32>
    %87 = arith.addf %85, %86 : vector<2x128xf32>
    %88 = vector.extract_strided_slice %87 {offsets = [0, 0], sizes = [2, 32], strides = [1, 1]} : vector<2x128xf32> to vector<2x32xf32>
    %89 = vector.extract_strided_slice %87 {offsets = [0, 32], sizes = [2, 32], strides = [1, 1]} : vector<2x128xf32> to vector<2x32xf32>
    %90 = vector.extract_strided_slice %87 {offsets = [0, 64], sizes = [2, 32], strides = [1, 1]} : vector<2x128xf32> to vector<2x32xf32>
    %91 = vector.extract_strided_slice %87 {offsets = [0, 96], sizes = [2, 32], strides = [1, 1]} : vector<2x128xf32> to vector<2x32xf32>
    %92 = arith.mulf %89, %69 : vector<2x32xf32>
    %93 = arith.mulf %88, %90 : vector<2x32xf32>
    %94 = arith.addf %92, %93 : vector<2x32xf32>
    %95 = math.tanh %94 : vector<2x32xf32>
    %96 = arith.mulf %91, %95 : vector<2x32xf32>
    %97 = arith.index_cast %c2_i32_29 : i32 to index
    %c0_33 = arith.constant 0 : index
    %c0_34 = arith.constant 0 : index
    %98 = vector.load %arg6[%97, %c0_33, %c0_34] : memref<8x2x32xf32, #tpu.memory_space<vmem>>, vector<1x2x32xf32>
    %99 = vector.shape_cast %98 : vector<1x2x32xf32> to vector<2x32xf32>
    %100 = vector.shape_cast %96 : vector<2x32xf32> to vector<1x2x32xf32>
    tpu.vector_store %arg6[%97, %c0_33, %c0_34], %100 {strides = array<i32>} : memref<8x2x32xf32, #tpu.memory_space<vmem>>, vector<1x2x32xf32>,
    %c3_i32 = arith.constant 3 : i32
    %c2_i32_35 = arith.constant 2 : i32
    %101 = arith.muli %c3_i32, %c2_i32_35 : i32
    %102 = arith.index_cast %101 : i32 to index
    %c0_36 = arith.constant 0 : index
    %103 = vector.load %arg9[%102, %c0_36] : memref<16x128xf32, #tpu.memory_space<vmem>>, vector<2x128xf32>
    %cst_37 = arith.constant dense<0.000000e+00> : vector<2x128xf32>
    %104 = tpu.matmul %96, %9, %cst_37 {dimension_numbers = #tpu.dot_dimension_numbers<[1], [0], [0], [1], [0, 0, 1, 1], [], []>} : vector<2x32xf32>, vector<32x128xf32>, vector<2x128xf32> -> vector<2x128xf32>
    %105 = arith.addf %103, %104 : vector<2x128xf32>
    %106 = vector.broadcast %18 : vector<1x128xf32> to vector<2x128xf32>
    %107 = arith.mulf %106, %105 : vector<2x128xf32>
    %108 = math.tanh %107 : vector<2x128xf32>
    %109 = vector.broadcast %18 : vector<1x128xf32> to vector<2x128xf32>
    %110 = arith.mulf %109, %108 : vector<2x128xf32>
    %111 = vector.broadcast %21 : vector<1x128xf32> to vector<2x128xf32>
    %112 = arith.addf %110, %111 : vector<2x128xf32>
    %113 = vector.extract_strided_slice %112 {offsets = [0, 0], sizes = [2, 32], strides = [1, 1]} : vector<2x128xf32> to vector<2x32xf32>
    %114 = vector.extract_strided_slice %112 {offsets = [0, 32], sizes = [2, 32], strides = [1, 1]} : vector<2x128xf32> to vector<2x32xf32>
    %115 = vector.extract_strided_slice %112 {offsets = [0, 64], sizes = [2, 32], strides = [1, 1]} : vector<2x128xf32> to vector<2x32xf32>
    %116 = vector.extract_strided_slice %112 {offsets = [0, 96], sizes = [2, 32], strides = [1, 1]} : vector<2x128xf32> to vector<2x32xf32>
    %117 = arith.mulf %114, %94 : vector<2x32xf32>
    %118 = arith.mulf %113, %115 : vector<2x32xf32>
    %119 = arith.addf %117, %118 : vector<2x32xf32>
    %120 = math.tanh %119 : vector<2x32xf32>
    %121 = arith.mulf %116, %120 : vector<2x32xf32>
    %122 = arith.index_cast %c3_i32 : i32 to index
    %c0_38 = arith.constant 0 : index
    %c0_39 = arith.constant 0 : index
    %123 = vector.load %arg6[%122, %c0_38, %c0_39] : memref<8x2x32xf32, #tpu.memory_space<vmem>>, vector<1x2x32xf32>
    %124 = vector.shape_cast %123 : vector<1x2x32xf32> to vector<2x32xf32>
    %125 = vector.shape_cast %121 : vector<2x32xf32> to vector<1x2x32xf32>
    tpu.vector_store %arg6[%122, %c0_38, %c0_39], %125 {strides = array<i32>} : memref<8x2x32xf32, #tpu.memory_space<vmem>>, vector<1x2x32xf32>,
    %c4_i32 = arith.constant 4 : i32
    %c2_i32_40 = arith.constant 2 : i32
    %126 = arith.muli %c4_i32, %c2_i32_40 : i32
    %127 = arith.index_cast %126 : i32 to index
    %c0_41 = arith.constant 0 : index
    %128 = vector.load %arg9[%127, %c0_41] : memref<16x128xf32, #tpu.memory_space<vmem>>, vector<2x128xf32>
    %cst_42 = arith.constant dense<0.000000e+00> : vector<2x128xf32>
    %129 = tpu.matmul %121, %9, %cst_42 {dimension_numbers = #tpu.dot_dimension_numbers<[1], [0], [0], [1], [0, 0, 1, 1], [], []>} : vector<2x32xf32>, vector<32x128xf32>, vector<2x128xf32> -> vector<2x128xf32>
    %130 = arith.addf %128, %129 : vector<2x128xf32>
    %131 = vector.broadcast %18 : vector<1x128xf32> to vector<2x128xf32>
    %132 = arith.mulf %131, %130 : vector<2x128xf32>
    %133 = math.tanh %132 : vector<2x128xf32>
    %134 = vector.broadcast %18 : vector<1x128xf32> to vector<2x128xf32>
    %135 = arith.mulf %134, %133 : vector<2x128xf32>
    %136 = vector.broadcast %21 : vector<1x128xf32> to vector<2x128xf32>
    %137 = arith.addf %135, %136 : vector<2x128xf32>
    %138 = vector.extract_strided_slice %137 {offsets = [0, 0], sizes = [2, 32], strides = [1, 1]} : vector<2x128xf32> to vector<2x32xf32>
    %139 = vector.extract_strided_slice %137 {offsets = [0, 32], sizes = [2, 32], strides = [1, 1]} : vector<2x128xf32> to vector<2x32xf32>
    %140 = vector.extract_strided_slice %137 {offsets = [0, 64], sizes = [2, 32], strides = [1, 1]} : vector<2x128xf32> to vector<2x32xf32>
    %141 = vector.extract_strided_slice %137 {offsets = [0, 96], sizes = [2, 32], strides = [1, 1]} : vector<2x128xf32> to vector<2x32xf32>
    %142 = arith.mulf %139, %119 : vector<2x32xf32>
    %143 = arith.mulf %138, %140 : vector<2x32xf32>
    %144 = arith.addf %142, %143 : vector<2x32xf32>
    %145 = math.tanh %144 : vector<2x32xf32>
    %146 = arith.mulf %141, %145 : vector<2x32xf32>
    %147 = arith.index_cast %c4_i32 : i32 to index
    %c0_43 = arith.constant 0 : index
    %c0_44 = arith.constant 0 : index
    %148 = vector.load %arg6[%147, %c0_43, %c0_44] : memref<8x2x32xf32, #tpu.memory_space<vmem>>, vector<1x2x32xf32>
    %149 = vector.shape_cast %148 : vector<1x2x32xf32> to vector<2x32xf32>
    %150 = vector.shape_cast %146 : vector<2x32xf32> to vector<1x2x32xf32>
    tpu.vector_store %arg6[%147, %c0_43, %c0_44], %150 {strides = array<i32>} : memref<8x2x32xf32, #tpu.memory_space<vmem>>, vector<1x2x32xf32>,
    %c5_i32 = arith.constant 5 : i32
    %c2_i32_45 = arith.constant 2 : i32
    %151 = arith.muli %c5_i32, %c2_i32_45 : i32
    %152 = arith.index_cast %151 : i32 to index
    %c0_46 = arith.constant 0 : index
    %153 = vector.load %arg9[%152, %c0_46] : memref<16x128xf32, #tpu.memory_space<vmem>>, vector<2x128xf32>
    %cst_47 = arith.constant dense<0.000000e+00> : vector<2x128xf32>
    %154 = tpu.matmul %146, %9, %cst_47 {dimension_numbers = #tpu.dot_dimension_numbers<[1], [0], [0], [1], [0, 0, 1, 1], [], []>} : vector<2x32xf32>, vector<32x128xf32>, vector<2x128xf32> -> vector<2x128xf32>
    %155 = arith.addf %153, %154 : vector<2x128xf32>
    %156 = vector.broadcast %18 : vector<1x128xf32> to vector<2x128xf32>
    %157 = arith.mulf %156, %155 : vector<2x128xf32>
    %158 = math.tanh %157 : vector<2x128xf32>
    %159 = vector.broadcast %18 : vector<1x128xf32> to vector<2x128xf32>
    %160 = arith.mulf %159, %158 : vector<2x128xf32>
    %161 = vector.broadcast %21 : vector<1x128xf32> to vector<2x128xf32>
    %162 = arith.addf %160, %161 : vector<2x128xf32>
    %163 = vector.extract_strided_slice %162 {offsets = [0, 0], sizes = [2, 32], strides = [1, 1]} : vector<2x128xf32> to vector<2x32xf32>
    %164 = vector.extract_strided_slice %162 {offsets = [0, 32], sizes = [2, 32], strides = [1, 1]} : vector<2x128xf32> to vector<2x32xf32>
    %165 = vector.extract_strided_slice %162 {offsets = [0, 64], sizes = [2, 32], strides = [1, 1]} : vector<2x128xf32> to vector<2x32xf32>
    %166 = vector.extract_strided_slice %162 {offsets = [0, 96], sizes = [2, 32], strides = [1, 1]} : vector<2x128xf32> to vector<2x32xf32>
    %167 = arith.mulf %164, %144 : vector<2x32xf32>
    %168 = arith.mulf %163, %165 : vector<2x32xf32>
    %169 = arith.addf %167, %168 : vector<2x32xf32>
    %170 = math.tanh %169 : vector<2x32xf32>
    %171 = arith.mulf %166, %170 : vector<2x32xf32>
    %172 = arith.index_cast %c5_i32 : i32 to index
    %c0_48 = arith.constant 0 : index
    %c0_49 = arith.constant 0 : index
    %173 = vector.load %arg6[%172, %c0_48, %c0_49] : memref<8x2x32xf32, #tpu.memory_space<vmem>>, vector<1x2x32xf32>
    %174 = vector.shape_cast %173 : vector<1x2x32xf32> to vector<2x32xf32>
    %175 = vector.shape_cast %171 : vector<2x32xf32> to vector<1x2x32xf32>
    tpu.vector_store %arg6[%172, %c0_48, %c0_49], %175 {strides = array<i32>} : memref<8x2x32xf32, #tpu.memory_space<vmem>>, vector<1x2x32xf32>,
    %c6_i32 = arith.constant 6 : i32
    %c2_i32_50 = arith.constant 2 : i32
    %176 = arith.muli %c6_i32, %c2_i32_50 : i32
    %177 = arith.index_cast %176 : i32 to index
    %c0_51 = arith.constant 0 : index
    %178 = vector.load %arg9[%177, %c0_51] : memref<16x128xf32, #tpu.memory_space<vmem>>, vector<2x128xf32>
    %cst_52 = arith.constant dense<0.000000e+00> : vector<2x128xf32>
    %179 = tpu.matmul %171, %9, %cst_52 {dimension_numbers = #tpu.dot_dimension_numbers<[1], [0], [0], [1], [0, 0, 1, 1], [], []>} : vector<2x32xf32>, vector<32x128xf32>, vector<2x128xf32> -> vector<2x128xf32>
    %180 = arith.addf %178, %179 : vector<2x128xf32>
    %181 = vector.broadcast %18 : vector<1x128xf32> to vector<2x128xf32>
    %182 = arith.mulf %181, %180 : vector<2x128xf32>
    %183 = math.tanh %182 : vector<2x128xf32>
    %184 = vector.broadcast %18 : vector<1x128xf32> to vector<2x128xf32>
    %185 = arith.mulf %184, %183 : vector<2x128xf32>
    %186 = vector.broadcast %21 : vector<1x128xf32> to vector<2x128xf32>
    %187 = arith.addf %185, %186 : vector<2x128xf32>
    %188 = vector.extract_strided_slice %187 {offsets = [0, 0], sizes = [2, 32], strides = [1, 1]} : vector<2x128xf32> to vector<2x32xf32>
    %189 = vector.extract_strided_slice %187 {offsets = [0, 32], sizes = [2, 32], strides = [1, 1]} : vector<2x128xf32> to vector<2x32xf32>
    %190 = vector.extract_strided_slice %187 {offsets = [0, 64], sizes = [2, 32], strides = [1, 1]} : vector<2x128xf32> to vector<2x32xf32>
    %191 = vector.extract_strided_slice %187 {offsets = [0, 96], sizes = [2, 32], strides = [1, 1]} : vector<2x128xf32> to vector<2x32xf32>
    %192 = arith.mulf %189, %169 : vector<2x32xf32>
    %193 = arith.mulf %188, %190 : vector<2x32xf32>
    %194 = arith.addf %192, %193 : vector<2x32xf32>
    %195 = math.tanh %194 : vector<2x32xf32>
    %196 = arith.mulf %191, %195 : vector<2x32xf32>
    %197 = arith.index_cast %c6_i32 : i32 to index
    %c0_53 = arith.constant 0 : index
    %c0_54 = arith.constant 0 : index
    %198 = vector.load %arg6[%197, %c0_53, %c0_54] : memref<8x2x32xf32, #tpu.memory_space<vmem>>, vector<1x2x32xf32>
    %199 = vector.shape_cast %198 : vector<1x2x32xf32> to vector<2x32xf32>
    %200 = vector.shape_cast %196 : vector<2x32xf32> to vector<1x2x32xf32>
    tpu.vector_store %arg6[%197, %c0_53, %c0_54], %200 {strides = array<i32>} : memref<8x2x32xf32, #tpu.memory_space<vmem>>, vector<1x2x32xf32>,
    %c7_i32 = arith.constant 7 : i32
    %c2_i32_55 = arith.constant 2 : i32
    %201 = arith.muli %c7_i32, %c2_i32_55 : i32
    %202 = arith.index_cast %201 : i32 to index
    %c0_56 = arith.constant 0 : index
    %203 = vector.load %arg9[%202, %c0_56] : memref<16x128xf32, #tpu.memory_space<vmem>>, vector<2x128xf32>
    %cst_57 = arith.constant dense<0.000000e+00> : vector<2x128xf32>
    %204 = tpu.matmul %196, %9, %cst_57 {dimension_numbers = #tpu.dot_dimension_numbers<[1], [0], [0], [1], [0, 0, 1, 1], [], []>} : vector<2x32xf32>, vector<32x128xf32>, vector<2x128xf32> -> vector<2x128xf32>
    %205 = arith.addf %203, %204 : vector<2x128xf32>
    %206 = vector.broadcast %18 : vector<1x128xf32> to vector<2x128xf32>
    %207 = arith.mulf %206, %205 : vector<2x128xf32>
    %208 = math.tanh %207 : vector<2x128xf32>
    %209 = vector.broadcast %18 : vector<1x128xf32> to vector<2x128xf32>
    %210 = arith.mulf %209, %208 : vector<2x128xf32>
    %211 = vector.broadcast %21 : vector<1x128xf32> to vector<2x128xf32>
    %212 = arith.addf %210, %211 : vector<2x128xf32>
    %213 = vector.extract_strided_slice %212 {offsets = [0, 0], sizes = [2, 32], strides = [1, 1]} : vector<2x128xf32> to vector<2x32xf32>
    %214 = vector.extract_strided_slice %212 {offsets = [0, 32], sizes = [2, 32], strides = [1, 1]} : vector<2x128xf32> to vector<2x32xf32>
    %215 = vector.extract_strided_slice %212 {offsets = [0, 64], sizes = [2, 32], strides = [1, 1]} : vector<2x128xf32> to vector<2x32xf32>
    %216 = vector.extract_strided_slice %212 {offsets = [0, 96], sizes = [2, 32], strides = [1, 1]} : vector<2x128xf32> to vector<2x32xf32>
    %217 = arith.mulf %214, %194 : vector<2x32xf32>
    %218 = arith.mulf %213, %215 : vector<2x32xf32>
    %219 = arith.addf %217, %218 : vector<2x32xf32>
    %220 = math.tanh %219 : vector<2x32xf32>
    %221 = arith.mulf %216, %220 : vector<2x32xf32>
    %222 = arith.index_cast %c7_i32 : i32 to index
    %c0_58 = arith.constant 0 : index
    %c0_59 = arith.constant 0 : index
    %223 = vector.load %arg6[%222, %c0_58, %c0_59] : memref<8x2x32xf32, #tpu.memory_space<vmem>>, vector<1x2x32xf32>
    %224 = vector.shape_cast %223 : vector<1x2x32xf32> to vector<2x32xf32>
    %225 = vector.shape_cast %221 : vector<2x32xf32> to vector<1x2x32xf32>
    tpu.vector_store %arg6[%222, %c0_58, %c0_59], %225 {strides = array<i32>} : memref<8x2x32xf32, #tpu.memory_space<vmem>>, vector<1x2x32xf32>,
    %c8_i32 = arith.constant 8 : i32
    %c0_60 = arith.constant 0 : index
    %c0_61 = arith.constant 0 : index
    %c0_62 = arith.constant 0 : index
    %226 = vector.load %arg7[%c0_60, %c0_61, %c0_62] : memref<1x2x32xf32, #tpu.memory_space<vmem>>, vector<1x2x32xf32>
    %227 = vector.shape_cast %226 : vector<1x2x32xf32> to vector<2x32xf32>
    %228 = vector.shape_cast %221 : vector<2x32xf32> to vector<1x2x32xf32>
    tpu.vector_store %arg7[%c0_60, %c0_61, %c0_62], %228 {strides = array<i32>} : memref<1x2x32xf32, #tpu.memory_space<vmem>>, vector<1x2x32xf32>,
    %c0_63 = arith.constant 0 : index
    %c0_64 = arith.constant 0 : index
    %c0_65 = arith.constant 0 : index
    %229 = vector.load %arg8[%c0_63, %c0_64, %c0_65] : memref<1x2x32xf32, #tpu.memory_space<vmem>>, vector<1x2x32xf32>
    %230 = vector.shape_cast %229 : vector<1x2x32xf32> to vector<2x32xf32>
    %231 = vector.shape_cast %219 : vector<2x32xf32> to vector<1x2x32xf32>
    tpu.vector_store %arg8[%c0_63, %c0_64, %c0_65], %231 {strides = array<i32>} : memref<1x2x32xf32, #tpu.memory_space<vmem>>, vector<1x2x32xf32>,
    return
  }
}

</mosaic_0001>

<llo_original>
// kernel: decoder_rnn_forward.1
$region0: #{decoder_rnn_forward.1}
  #allocation0 [shape = 'u32[]', space=smem, size = 0x4, offset = 0x4, fixed_abs, tag = 'smem constant byte address 0x4 - core index']
  #allocation1 [shape = 'u32[144,128]{1,0:T(1,128)}', space=vmem, size = 0x12000, scoped, tag = 'internal scratch']
  #allocation2 [shape = 'f32[16,128]{1,0:T(8,128)}', space=vmem, size = 0x2000, scoped, tag = 'scratch operand']
  %s0 = inlined_call_operand.hbm [shape: f32[16,16], index: 0, kind: input, shape index: {}]
  %s1 = inlined_call_operand.vmem [shape: f32[1,2,32], index: 1, kind: input, shape index: {}]
  %s2 = inlined_call_operand.vmem [shape: f32[1,2,32], index: 2, kind: input, shape index: {}]
  %s3 = inlined_call_operand.vmem [shape: f32[16,128], index: 3, kind: input, shape index: {}]
  %s4 = inlined_call_operand.hbm [shape: f32[32,128], index: 4, kind: input, shape index: {}]
  %s5 = inlined_call_operand.vmem [shape: f32[1,128], index: 5, kind: input, shape index: {}]
  %s6 = inlined_call_operand.hbm [shape: f32[8,2,32], index: 6, kind: output, shape index: {0}]
  %s7 = inlined_call_operand.hbm [shape: f32[1,2,32], index: 7, kind: output, shape index: {1}]
  %s8 = inlined_call_operand.hbm [shape: f32[1,2,32], index: 8, kind: output, shape index: {2}]
  %9 = xla_tuple %s6, %s7, %s8
  %s10 = sld [smem:[#allocation0]]
  $region58: #{decoder_rnn_forward.1} parent=0
    _
  %s12 = ssub.s32 1, %s10
  %s13 = scalar_select 0, %s12, %s10
  $region1: #{decoder_rnn_forward.1} parent=0
    #allocation3 [shape = 'u8[8192]{0}', space=vmem, size = 0x2000, scoped, tag = 'input window, operand 0, single buffered']
    #allocation4 [shape = 's32[1]{0}', space=sflag, size = 0x4, scoped, tag = 'scoped memory for decoder_rnn_forward.1']
    #allocation5 [shape = 's32[1]{0}', space=sflag, size = 0x4, scoped, tag = 'scoped memory for decoder_rnn_forward.1']
    #allocation6 [shape = 'u8[16384]{0}', space=vmem, size = 0x4000, scoped, tag = 'input window, operand 4, single buffered']
    #allocation7 [shape = 's32[1]{0}', space=sflag, size = 0x4, scoped, tag = 'scoped memory for decoder_rnn_forward.1']
    #allocation8 [shape = 'u8[8192]{0}', space=vmem, size = 0x2000, scoped, tag = 'output window, operand 0, single buffered']
    #allocation9 [shape = 'u8[1024]{0}', space=vmem, size = 0x400, scoped, tag = 'output window, operand 1, single buffered']
    #allocation10 [shape = 's32[1]{0}', space=sflag, size = 0x4, scoped, tag = 'scoped memory for decoder_rnn_forward.1']
    #allocation11 [shape = 'u8[1024]{0}', space=vmem, size = 0x400, scoped, tag = 'output window, operand 2, single buffered']
    %14 = vsyncpa [#allocation4], 0
    %15 = vsyncpa [#allocation7], 0
    %16 = vsyncpa [#allocation5], 0
    %17 = vsyncpa [#allocation10], 0
    // Predicated region
    $region2: #{decoder_rnn_forward.1} parent=1 // pred_check
      _
    $region3: #{decoder_rnn_forward.1} parent=1 // pred_check_branch
      %19 = sbr.rel (0) target = $region5
    $region4: #{decoder_rnn_forward.1} parent=1 // pred_region
      %s21 = ssub.s32 256, 256
      %22 = vsyncadd [#allocation4], %s21
      %s23 = sshll.u32 [#allocation3], 4
      %s24 = int_to_ptr.vmem [resolvable:$true] %s23
      %29 = dma.hbm_to_vmem [thread:$0]  %s0, 256, %s24, [#allocation4], 128, 128, 8
    $region5: #{decoder_rnn_forward.1} parent=1 // pred_fallthru
      _
    // Predicated region
    $region6: #{decoder_rnn_forward.1} parent=1 // pred_check
      _
    $region7: #{decoder_rnn_forward.1} parent=1 // pred_check_branch
      %31 = sbr.rel (0) target = $region9
    $region8: #{decoder_rnn_forward.1} parent=1 // pred_region
      _
    $region9: #{decoder_rnn_forward.1} parent=1 // pred_fallthru
      _
    // Predicated region
    $region10: #{decoder_rnn_forward.1} parent=1 // pred_check
      _
    $region11: #{decoder_rnn_forward.1} parent=1 // pred_check_branch
      %33 = sbr.rel (0) target = $region13
    $region12: #{decoder_rnn_forward.1} parent=1 // pred_region
      _
    $region13: #{decoder_rnn_forward.1} parent=1 // pred_fallthru
      _
    // Predicated region
    $region14: #{decoder_rnn_forward.1} parent=1 // pred_check
      _
    $region15: #{decoder_rnn_forward.1} parent=1 // pred_check_branch
      %35 = sbr.rel (0) target = $region17
    $region16: #{decoder_rnn_forward.1} parent=1 // pred_region
      _
    $region17: #{decoder_rnn_forward.1} parent=1 // pred_fallthru
      _
    // Predicated region
    $region18: #{decoder_rnn_forward.1} parent=1 // pred_check
      _
    $region19: #{decoder_rnn_forward.1} parent=1 // pred_check_branch
      %37 = sbr.rel (0) target = $region21
    $region20: #{decoder_rnn_forward.1} parent=1 // pred_region
      %s39 = ssub.s32 512, 512
      %40 = vsyncadd [#allocation7], %s39
      %s41 = sshll.u32 [#allocation6], 4
      %s42 = int_to_ptr.vmem [resolvable:$true] %s41
      %47 = dma.hbm_to_vmem [thread:$0]  %s4, 512, %s42, [#allocation7], 128, 128, 8
    $region21: #{decoder_rnn_forward.1} parent=1 // pred_fallthru
      _
    // Predicated region
    $region22: #{decoder_rnn_forward.1} parent=1 // pred_check
      _
    $region23: #{decoder_rnn_forward.1} parent=1 // pred_check_branch
      %49 = sbr.rel (0) target = $region25
    $region24: #{decoder_rnn_forward.1} parent=1 // pred_region
      _
    $region25: #{decoder_rnn_forward.1} parent=1 // pred_fallthru
      _
    // Predicated region
    $region26: #{decoder_rnn_forward.1} parent=1 // pred_check
      _
    $region27: #{decoder_rnn_forward.1} parent=1 // pred_check_branch
      %51 = sbr.rel (0) target = $region29
    $region28: #{decoder_rnn_forward.1} parent=1 // pred_region
      %52 = dma.done [#allocation4], 256
    $region29: #{decoder_rnn_forward.1} parent=1 // pred_fallthru
      _
    // Predicated region
    $region30: #{decoder_rnn_forward.1} parent=1 // pred_check
      _
    $region31: #{decoder_rnn_forward.1} parent=1 // pred_check_branch
      %54 = sbr.rel (0) target = $region33
    $region32: #{decoder_rnn_forward.1} parent=1 // pred_region
      %55 = dma.done [#allocation7], 512
    $region33: #{decoder_rnn_forward.1} parent=1 // pred_fallthru
      _
    %v56 = vld [vmem:[#allocation3] sm:$0xff]
    %v57 = vld [vmem:[#allocation3 + $0x8] sm:$0xff]
    %v58 = vmax.f32 %v56, 0.0
    %v59 = vmax.f32 %v57, 0.0
    %v60 = vld [vmem:[%s3] sm:$0xff]
    %v61 = vld [vmem:[%s3 + $0x8] sm:$0xff]
    %v62 = vld [vmem:[%s5] sm:$0x1]
    %v64 = vlaneseq
    %v65 = vshrl.u32 %v64, 7
    %v66 = vsub.s32 0, %v65
    %v67 = vrot.slane %v62, %v66
    %vm69 = vcmask 130048
    %v71 = vsel %vm69, %v58, 0
    %v74 = vsel %vm69, %v59, 0
    %76 = vmatprep.subr.mxu0 0.0
    %77 = vmatpush1.msra.mxu0 %v60
    %78 = vmatprep.subr.mxu0 0.0
    %79 = vmatpush1.msra.mxu0 %v61
    %80 = vmatprep.subr.mxu0 0.0
    %81 = vmatpush1.msra.mxu0 0.0
    %82 = vmatprep.subr.mxu0 0.0
    %83 = vmatpush1.msra.mxu0 0.0
    %84 = vmatprep.subr.mxu0 0.0
    %85 = vmatpush1.msra.mxu0 0.0
    %86 = vmatprep.subr.mxu0 0.0
    %87 = vmatpush1.msra.mxu0 0.0
    %88 = vmatprep.subr.mxu0 0.0
    %89 = vmatpush1.msra.mxu0 0.0
    %90 = vmatprep.subr.mxu0 0.0
    %91 = vmatpush1.msra.mxu0 0.0
    %92 = vmatprep.subr.mxu0 0.0
    %93 = vmatpush1.msra.mxu0 0.0
    %94 = vmatprep.subr.mxu0 0.0
    %95 = vmatpush1.msra.mxu0 0.0
    %96 = vmatprep.subr.mxu0 0.0
    %97 = vmatpush1.msra.mxu0 0.0
    %98 = vmatprep.subr.mxu0 0.0
    %99 = vmatpush1.msra.mxu0 0.0
    %100 = vmatprep.subr.mxu0 0.0
    %101 = vmatpush1.msra.mxu0 0.0
    %102 = vmatprep.subr.mxu0 0.0
    %103 = vmatpush1.msra.mxu0 0.0
    %104 = vmatprep.subr.mxu0 0.0
    %105 = vmatpush1.msra.mxu0 0.0
    %106 = vmatprep.subr.mxu0 0.0
    %107 = vmatpush1.msra.mxu0 0.0
    %108 = vmatprep.subr.mxu0 0.0
    %109 = vmatpush1.msra.mxu0 0.0
    %110 = vmatprep.subr.mxu0 0.0
    %111 = vmatpush1.msra.mxu0 0.0
    %112 = vmatprep.subr.mxu0 0.0
    %113 = vmatpush1.msra.mxu0 0.0
    %114 = vmatprep.subr.mxu0 0.0
    %115 = vmatpush1.msra.mxu0 0.0
    %116 = vmatprep.subr.mxu0 0.0
    %117 = vmatpush1.msra.mxu0 0.0
    %118 = vmatprep.subr.mxu0 0.0
    %119 = vmatpush1.msra.mxu0 0.0
    %120 = vmatprep.subr.mxu0 0.0
    %121 = vmatpush1.msra.mxu0 0.0
    %122 = vmatprep.subr.mxu0 0.0
    %123 = vmatpush1.msra.mxu0 0.0
    %124 = vmatprep.subr.mxu0 0.0
    %125 = vmatpush1.msra.mxu0 0.0
    %126 = vmatprep.subr.mxu0 0.0
    %127 = vmatpush1.msra.mxu0 0.0
    %128 = vmatprep.subr.mxu0 0.0
    %129 = vmatpush1.msra.mxu0 0.0
    %130 = vmatprep.subr.mxu0 0.0
    %131 = vmatpush1.msra.mxu0 0.0
    %132 = vmatprep.subr.mxu0 0.0
    %133 = vmatpush1.msra.mxu0 0.0
    %134 = vmatprep.subr.mxu0 0.0
    %135 = vmatpush1.msra.mxu0 0.0
    %136 = vmatprep.subr.mxu0 0.0
    %137 = vmatpush1.msra.mxu0 0.0
    %138 = vmatprep.subr.mxu0 0.0
    %139 = vmatpush1.msra.mxu0 0.0
    %140 = vmatprep.mubr.f32.mxu0 0.0
    %141 = vmatmul.mubr.f32.gmra.mrb[0].mxu0 %v71
    %v142 = vpop.f32.mrb[0].mxu0
    %v143 = vadd.f32 %v67, %v142
    %v144 = vpop.f32.mrb[0].mxu0
    %145 = vmatprep.mubr.f32.mxu0 0.0
    %146 = vmatmul.mubr.f32.gmra.mrb[0].mxu0 %v74
    %v147 = vpop.f32.mrb[0].mxu0
    %v148 = vadd.f32 %v67, %v147
    %v149 = vpop.f32.mrb[0].mxu0
    %150 = vdwg.mxu0
    %151 = vst [vmem:[#allocation2] sm:$0xff] %v143
    %152 = vst [vmem:[#allocation2 + $0x8] sm:$0xff] %v148
    %v153 = vld [vmem:[#allocation6] sm:$0xff]
    %v154 = vld [vmem:[#allocation6 + $0x8] sm:$0xff]
    %v155 = vld [vmem:[#allocation6 + $0x10] sm:$0xff]
    %v156 = vld [vmem:[#allocation6 + $0x18] sm:$0xff]
    %v157 = vlaneseq
    %v158 = vand.u32 %v157, 127
    %vm159 = vcmp.ge.s32.totalorder %v158, 64
    %vm160 = vcmp.lt.s32.totalorder %v158, 96
    %vm161 = vmand %vm159, %vm160
    %v162 = vsel %vm161, 1.0, 0.5
    %v163 = vsel %vm161, 0.0, 0.5
    %v164 = vld [vmem:[%s1] sm:$0x3]
    %v165 = vld [vmem:[%s2] sm:$0x3]
    %v166 = vld [vmem:[#allocation2] sm:$0x3]
    %vm167 = vcmask 261120
    %v169 = vsel %vm167, %v164, 0
    %171 = vmatprep.subr.mxu0 0.0
    %172 = vmatpush1.msra.mxu0 %v153
    %173 = vmatprep.subr.mxu0 0.0
    %174 = vmatpush1.msra.mxu0 %v154
    %175 = vmatprep.subr.mxu0 0.0
    %176 = vmatpush1.msra.mxu0 %v155
    %177 = vmatprep.subr.mxu0 0.0
    %178 = vmatpush1.msra.mxu0 %v156
    %179 = vmatprep.subr.mxu0 0.0
    %180 = vmatpush1.msra.mxu0 0.0
    %181 = vmatprep.subr.mxu0 0.0
    %182 = vmatpush1.msra.mxu0 0.0
    %183 = vmatprep.subr.mxu0 0.0
    %184 = vmatpush1.msra.mxu0 0.0
    %185 = vmatprep.subr.mxu0 0.0
    %186 = vmatpush1.msra.mxu0 0.0
    %187 = vmatprep.subr.mxu0 0.0
    %188 = vmatpush1.msra.mxu0 0.0
    %189 = vmatprep.subr.mxu0 0.0
    %190 = vmatpush1.msra.mxu0 0.0
    %191 = vmatprep.subr.mxu0 0.0
    %192 = vmatpush1.msra.mxu0 0.0
    %193 = vmatprep.subr.mxu0 0.0
    %194 = vmatpush1.msra.mxu0 0.0
    %195 = vmatprep.subr.mxu0 0.0
    %196 = vmatpush1.msra.mxu0 0.0
    %197 = vmatprep.subr.mxu0 0.0
    %198 = vmatpush1.msra.mxu0 0.0
    %199 = vmatprep.subr.mxu0 0.0
    %200 = vmatpush1.msra.mxu0 0.0
    %201 = vmatprep.subr.mxu0 0.0
    %202 = vmatpush1.msra.mxu0 0.0
    %203 = vmatprep.subr.mxu0 0.0
    %204 = vmatpush1.msra.mxu0 0.0
    %205 = vmatprep.subr.mxu0 0.0
    %206 = vmatpush1.msra.mxu0 0.0
    %207 = vmatprep.subr.mxu0 0.0
    %208 = vmatpush1.msra.mxu0 0.0
    %209 = vmatprep.subr.mxu0 0.0
    %210 = vmatpush1.msra.mxu0 0.0
    %211 = vmatprep.subr.mxu0 0.0
    %212 = vmatpush1.msra.mxu0 0.0
    %213 = vmatprep.subr.mxu0 0.0
    %214 = vmatpush1.msra.mxu0 0.0
    %215 = vmatprep.subr.mxu0 0.0
    %216 = vmatpush1.msra.mxu0 0.0
    %217 = vmatprep.subr.mxu0 0.0
    %218 = vmatpush1.msra.mxu0 0.0
    %219 = vmatprep.subr.mxu0 0.0
    %220 = vmatpush1.msra.mxu0 0.0
    %221 = vmatprep.subr.mxu0 0.0
    %222 = vmatpush1.msra.mxu0 0.0
    %223 = vmatprep.subr.mxu0 0.0
    %224 = vmatpush1.msra.mxu0 0.0
    %225 = vmatprep.subr.mxu0 0.0
    %226 = vmatpush1.msra.mxu0 0.0
    %227 = vmatprep.subr.mxu0 0.0
    %228 = vmatpush1.msra.mxu0 0.0
    %229 = vmatprep.subr.mxu0 0.0
    %230 = vmatpush1.msra.mxu0 0.0
    %231 = vmatprep.subr.mxu0 0.0
    %232 = vmatpush1.msra.mxu0 0.0
    %233 = vmatprep.subr.mxu0 0.0
    %234 = vmatpush1.msra.mxu0 0.0
    %235 = vmatprep.mubr.f32.mxu0 0.0
    %236 = vmatmul.mubr.f32.gmra.mrb[0].mxu0 %v169
    %v237 = vpop.f32.mrb[0].mxu0
    %v238 = vadd.f32 0.0, %v237
    %v239 = vpop.f32.mrb[0].mxu0
    %240 = vdwg.mxu0
    %v241 = vadd.f32 %v166, %v238
    %v242 = vmul.f32 %v162, %v241
    %v243 = vtanh.pop %v242
    %v244 = vmul.f32 %v162, %v243
    %v245 = vadd.f32 %v244, %v163
    %247 = vrot.lane.b32.xlu0 %v165, 32
    %v248 = vpop.permute.xlu0 %247
    %v250 = vmul.f32 %v245, %v248
    %252 = vrot.lane.b32.xlu0 %v245, 64
    %v253 = vpop.permute.xlu0 %252
    %v255 = vmul.f32 %v245, %v253
    %257 = vrot.lane.b32.xlu0 %v255, 32
    %v258 = vpop.permute.xlu0 %257
    %v260 = vadd.f32 %v250, %v258
    %v261 = vtanh.pop %v260
    %263 = vrot.lane.b32.xlu0 %v261, 64
    %v264 = vpop.permute.xlu0 %263
    %v266 = vmul.f32 %v245, %v264
    %268 = vrot.lane.b32.xlu0 %v266, 32
    %v269 = vpop.permute.xlu0 %268
    %vm271 = vcmask 254976
    %272 = vst.msk [vmem:[#allocation8] sm:$0x3] %vm271, %v269
    %v273 = vld [vmem:[#allocation2 + $0x2] sm:$0x3]
    %v274 = vsel %vm167, %v269, 0
    %276 = vmatprep.subr.mxu0 0.0
    %277 = vmatpush1.msra.mxu0 %v153
    %278 = vmatprep.subr.mxu0 0.0
    %279 = vmatpush1.msra.mxu0 %v154
    %280 = vmatprep.subr.mxu0 0.0
    %281 = vmatpush1.msra.mxu0 %v155
    %282 = vmatprep.subr.mxu0 0.0
    %283 = vmatpush1.msra.mxu0 %v156
    %284 = vmatprep.subr.mxu0 0.0
    %285 = vmatpush1.msra.mxu0 0.0
    %286 = vmatprep.subr.mxu0 0.0
    %287 = vmatpush1.msra.mxu0 0.0
    %288 = vmatprep.subr.mxu0 0.0
    %289 = vmatpush1.msra.mxu0 0.0
    %290 = vmatprep.subr.mxu0 0.0
    %291 = vmatpush1.msra.mxu0 0.0
    %292 = vmatprep.subr.mxu0 0.0
    %293 = vmatpush1.msra.mxu0 0.0
    %294 = vmatprep.subr.mxu0 0.0
    %295 = vmatpush1.msra.mxu0 0.0
    %296 = vmatprep.subr.mxu0 0.0
    %297 = vmatpush1.msra.mxu0 0.0
    %298 = vmatprep.subr.mxu0 0.0
    %299 = vmatpush1.msra.mxu0 0.0
    %300 = vmatprep.subr.mxu0 0.0
    %301 = vmatpush1.msra.mxu0 0.0
    %302 = vmatprep.subr.mxu0 0.0
    %303 = vmatpush1.msra.mxu0 0.0
    %304 = vmatprep.subr.mxu0 0.0
    %305 = vmatpush1.msra.mxu0 0.0
    %306 = vmatprep.subr.mxu0 0.0
    %307 = vmatpush1.msra.mxu0 0.0
    %308 = vmatprep.subr.mxu0 0.0
    %309 = vmatpush1.msra.mxu0 0.0
    %310 = vmatprep.subr.mxu0 0.0
    %311 = vmatpush1.msra.mxu0 0.0
    %312 = vmatprep.subr.mxu0 0.0
    %313 = vmatpush1.msra.mxu0 0.0
    %314 = vmatprep.subr.mxu0 0.0
    %315 = vmatpush1.msra.mxu0 0.0
    %316 = vmatprep.subr.mxu0 0.0
    %317 = vmatpush1.msra.mxu0 0.0
    %318 = vmatprep.subr.mxu0 0.0
    %319 = vmatpush1.msra.mxu0 0.0
    %320 = vmatprep.subr.mxu0 0.0
    %321 = vmatpush1.msra.mxu0 0.0
    %322 = vmatprep.subr.mxu0 0.0
    %323 = vmatpush1.msra.mxu0 0.0
    %324 = vmatprep.subr.mxu0 0.0
    %325 = vmatpush1.msra.mxu0 0.0
    %326 = vmatprep.subr.mxu0 0.0
    %327 = vmatpush1.msra.mxu0 0.0
    %328 = vmatprep.subr.mxu0 0.0
    %329 = vmatpush1.msra.mxu0 0.0
    %330 = vmatprep.subr.mxu0 0.0
    %331 = vmatpush1.msra.mxu0 0.0
    %332 = vmatprep.subr.mxu0 0.0
    %333 = vmatpush1.msra.mxu0 0.0
    %334 = vmatprep.subr.mxu0 0.0
    %335 = vmatpush1.msra.mxu0 0.0
    %336 = vmatprep.subr.mxu0 0.0
    %337 = vmatpush1.msra.mxu0 0.0
    %338 = vmatprep.subr.mxu0 0.0
    %339 = vmatpush1.msra.mxu0 0.0
    %340 = vmatprep.mubr.f32.mxu0 0.0
    %341 = vmatmul.mubr.f32.gmra.mrb[0].mxu0 %v274
    %v342 = vpop.f32.mrb[0].mxu0
    %v343 = vadd.f32 0.0, %v342
    %v344 = vpop.f32.mrb[0].mxu0
    %345 = vdwg.mxu0
    %v346 = vadd.f32 %v273, %v343
    %v347 = vmul.f32 %v162, %v346
    %v348 = vtanh.pop %v347
    %v349 = vmul.f32 %v162, %v348
    %v350 = vadd.f32 %v349, %v163
    %v351 = vmul.f32 %v350, %v260
    %353 = vrot.lane.b32.xlu0 %v350, 64
    %v354 = vpop.permute.xlu0 %353
    %v356 = vmul.f32 %v350, %v354
    %358 = vrot.lane.b32.xlu0 %v356, 32
    %v359 = vpop.permute.xlu0 %358
    %v361 = vadd.f32 %v351, %v359
    %v362 = vtanh.pop %v361
    %364 = vrot.lane.b32.xlu0 %v362, 64
    %v365 = vpop.permute.xlu0 %364
    %v367 = vmul.f32 %v350, %v365
    %369 = vrot.lane.b32.xlu0 %v367, 32
    %v370 = vpop.permute.xlu0 %369
    %s372 = scalar_lea.vmem [#allocation8], 2
    %373 = vst.msk [vmem:[%s372] sm:$0x3] %vm271, %v370
    %v374 = vld [vmem:[#allocation2 + $0x4] sm:$0x3]
    %v375 = vsel %vm167, %v370, 0
    %377 = vmatprep.subr.mxu0 0.0
    %378 = vmatpush1.msra.mxu0 %v153
    %379 = vmatprep.subr.mxu0 0.0
    %380 = vmatpush1.msra.mxu0 %v154
    %381 = vmatprep.subr.mxu0 0.0
    %382 = vmatpush1.msra.mxu0 %v155
    %383 = vmatprep.subr.mxu0 0.0
    %384 = vmatpush1.msra.mxu0 %v156
    %385 = vmatprep.subr.mxu0 0.0
    %386 = vmatpush1.msra.mxu0 0.0
    %387 = vmatprep.subr.mxu0 0.0
    %388 = vmatpush1.msra.mxu0 0.0
    %389 = vmatprep.subr.mxu0 0.0
    %390 = vmatpush1.msra.mxu0 0.0
    %391 = vmatprep.subr.mxu0 0.0
    %392 = vmatpush1.msra.mxu0 0.0
    %393 = vmatprep.subr.mxu0 0.0
    %394 = vmatpush1.msra.mxu0 0.0
    %395 = vmatprep.subr.mxu0 0.0
    %396 = vmatpush1.msra.mxu0 0.0
    %397 = vmatprep.subr.mxu0 0.0
    %398 = vmatpush1.msra.mxu0 0.0
    %399 = vmatprep.subr.mxu0 0.0
    %400 = vmatpush1.msra.mxu0 0.0
    %401 = vmatprep.subr.mxu0 0.0
    %402 = vmatpush1.msra.mxu0 0.0
    %403 = vmatprep.subr.mxu0 0.0
    %404 = vmatpush1.msra.mxu0 0.0
    %405 = vmatprep.subr.mxu0 0.0
    %406 = vmatpush1.msra.mxu0 0.0
    %407 = vmatprep.subr.mxu0 0.0
    %408 = vmatpush1.msra.mxu0 0.0
    %409 = vmatprep.subr.mxu0 0.0
    %410 = vmatpush1.msra.mxu0 0.0
    %411 = vmatprep.subr.mxu0 0.0
    %412 = vmatpush1.msra.mxu0 0.0
    %413 = vmatprep.subr.mxu0 0.0
    %414 = vmatpush1.msra.mxu0 0.0
    %415 = vmatprep.subr.mxu0 0.0
    %416 = vmatpush1.msra.mxu0 0.0
    %417 = vmatprep.subr.mxu0 0.0
    %418 = vmatpush1.msra.mxu0 0.0
    %419 = vmatprep.subr.mxu0 0.0
    %420 = vmatpush1.msra.mxu0 0.0
    %421 = vmatprep.subr.mxu0 0.0
    %422 = vmatpush1.msra.mxu0 0.0
    %423 = vmatprep.subr.mxu0 0.0
    %424 = vmatpush1.msra.mxu0 0.0
    %425 = vmatprep.subr.mxu0 0.0
    %426 = vmatpush1.msra.mxu0 0.0
    %427 = vmatprep.subr.mxu0 0.0
    %428 = vmatpush1.msra.mxu0 0.0
    %429 = vmatprep.subr.mxu0 0.0
    %430 = vmatpush1.msra.mxu0 0.0
    %431 = vmatprep.subr.mxu0 0.0
    %432 = vmatpush1.msra.mxu0 0.0
    %433 = vmatprep.subr.mxu0 0.0
    %434 = vmatpush1.msra.mxu0 0.0
    %435 = vmatprep.subr.mxu0 0.0
    %436 = vmatpush1.msra.mxu0 0.0
    %437 = vmatprep.subr.mxu0 0.0
    %438 = vmatpush1.msra.mxu0 0.0
    %439 = vmatprep.subr.mxu0 0.0
    %440 = vmatpush1.msra.mxu0 0.0
    %441 = vmatprep.mubr.f32.mxu0 0.0
    %442 = vmatmul.mubr.f32.gmra.mrb[0].mxu0 %v375
    %v443 = vpop.f32.mrb[0].mxu0
    %v444 = vadd.f32 0.0, %v443
    %v445 = vpop.f32.mrb[0].mxu0
    %446 = vdwg.mxu0
    %v447 = vadd.f32 %v374, %v444
    %v448 = vmul.f32 %v162, %v447
    %v449 = vtanh.pop %v448
    %v450 = vmul.f32 %v162, %v449
    %v451 = vadd.f32 %v450, %v163
    %v452 = vmul.f32 %v451, %v361
    %454 = vrot.lane.b32.xlu0 %v451, 64
    %v455 = vpop.permute.xlu0 %454
    %v457 = vmul.f32 %v451, %v455
    %459 = vrot.lane.b32.xlu0 %v457, 32
    %v460 = vpop.permute.xlu0 %459
    %v462 = vadd.f32 %v452, %v460
    %v463 = vtanh.pop %v462
    %465 = vrot.lane.b32.xlu0 %v463, 64
    %v466 = vpop.permute.xlu0 %465
    %v468 = vmul.f32 %v451, %v466
    %470 = vrot.lane.b32.xlu0 %v468, 32
    %v471 = vpop.permute.xlu0 %470
    %s473 = scalar_lea.vmem [#allocation8], 4
    %474 = vst.msk [vmem:[%s473] sm:$0x3] %vm271, %v471
    %v475 = vld [vmem:[#allocation2 + $0x6] sm:$0x3]
    %v476 = vsel %vm167, %v471, 0
    %478 = vmatprep.subr.mxu0 0.0
    %479 = vmatpush1.msra.mxu0 %v153
    %480 = vmatprep.subr.mxu0 0.0
    %481 = vmatpush1.msra.mxu0 %v154
    %482 = vmatprep.subr.mxu0 0.0
    %483 = vmatpush1.msra.mxu0 %v155
    %484 = vmatprep.subr.mxu0 0.0
    %485 = vmatpush1.msra.mxu0 %v156
    %486 = vmatprep.subr.mxu0 0.0
    %487 = vmatpush1.msra.mxu0 0.0
    %488 = vmatprep.subr.mxu0 0.0
    %489 = vmatpush1.msra.mxu0 0.0
    %490 = vmatprep.subr.mxu0 0.0
    %491 = vmatpush1.msra.mxu0 0.0
    %492 = vmatprep.subr.mxu0 0.0
    %493 = vmatpush1.msra.mxu0 0.0
    %494 = vmatprep.subr.mxu0 0.0
    %495 = vmatpush1.msra.mxu0 0.0
    %496 = vmatprep.subr.mxu0 0.0
    %497 = vmatpush1.msra.mxu0 0.0
    %498 = vmatprep.subr.mxu0 0.0
    %499 = vmatpush1.msra.mxu0 0.0
    %500 = vmatprep.subr.mxu0 0.0
    %501 = vmatpush1.msra.mxu0 0.0
    %502 = vmatprep.subr.mxu0 0.0
    %503 = vmatpush1.msra.mxu0 0.0
    %504 = vmatprep.subr.mxu0 0.0
    %505 = vmatpush1.msra.mxu0 0.0
    %506 = vmatprep.subr.mxu0 0.0
    %507 = vmatpush1.msra.mxu0 0.0
    %508 = vmatprep.subr.mxu0 0.0
    %509 = vmatpush1.msra.mxu0 0.0
    %510 = vmatprep.subr.mxu0 0.0
    %511 = vmatpush1.msra.mxu0 0.0
    %512 = vmatprep.subr.mxu0 0.0
    %513 = vmatpush1.msra.mxu0 0.0
    %514 = vmatprep.subr.mxu0 0.0
    %515 = vmatpush1.msra.mxu0 0.0
    %516 = vmatprep.subr.mxu0 0.0
    %517 = vmatpush1.msra.mxu0 0.0
    %518 = vmatprep.subr.mxu0 0.0
    %519 = vmatpush1.msra.mxu0 0.0
    %520 = vmatprep.subr.mxu0 0.0
    %521 = vmatpush1.msra.mxu0 0.0
    %522 = vmatprep.subr.mxu0 0.0
    %523 = vmatpush1.msra.mxu0 0.0
    %524 = vmatprep.subr.mxu0 0.0
    %525 = vmatpush1.msra.mxu0 0.0
    %526 = vmatprep.subr.mxu0 0.0
    %527 = vmatpush1.msra.mxu0 0.0
    %528 = vmatprep.subr.mxu0 0.0
    %529 = vmatpush1.msra.mxu0 0.0
    %530 = vmatprep.subr.mxu0 0.0
    %531 = vmatpush1.msra.mxu0 0.0
    %532 = vmatprep.subr.mxu0 0.0
    %533 = vmatpush1.msra.mxu0 0.0
    %534 = vmatprep.subr.mxu0 0.0
    %535 = vmatpush1.msra.mxu0 0.0
    %536 = vmatprep.subr.mxu0 0.0
    %537 = vmatpush1.msra.mxu0 0.0
    %538 = vmatprep.subr.mxu0 0.0
    %539 = vmatpush1.msra.mxu0 0.0
    %540 = vmatprep.subr.mxu0 0.0
    %541 = vmatpush1.msra.mxu0 0.0
    %542 = vmatprep.mubr.f32.mxu0 0.0
    %543 = vmatmul.mubr.f32.gmra.mrb[0].mxu0 %v476
    %v544 = vpop.f32.mrb[0].mxu0
    %v545 = vadd.f32 0.0, %v544
    %v546 = vpop.f32.mrb[0].mxu0
    %547 = vdwg.mxu0
    %v548 = vadd.f32 %v475, %v545
    %v549 = vmul.f32 %v162, %v548
    %v550 = vtanh.pop %v549
    %v551 = vmul.f32 %v162, %v550
    %v552 = vadd.f32 %v551, %v163
    %v553 = vmul.f32 %v552, %v462
    %555 = vrot.lane.b32.xlu0 %v552, 64
    %v556 = vpop.permute.xlu0 %555
    %v558 = vmul.f32 %v552, %v556
    %560 = vrot.lane.b32.xlu0 %v558, 32
    %v561 = vpop.permute.xlu0 %560
    %v563 = vadd.f32 %v553, %v561
    %v564 = vtanh.pop %v563
    %566 = vrot.lane.b32.xlu0 %v564, 64
    %v567 = vpop.permute.xlu0 %566
    %v569 = vmul.f32 %v552, %v567
    %571 = vrot.lane.b32.xlu0 %v569, 32
    %v572 = vpop.permute.xlu0 %571
    %s574 = scalar_lea.vmem [#allocation8], 6
    %575 = vst.msk [vmem:[%s574] sm:$0x3] %vm271, %v572
    %v576 = vld [vmem:[#allocation2 + $0x8] sm:$0x3]
    %v577 = vsel %vm167, %v572, 0
    %579 = vmatprep.subr.mxu0 0.0
    %580 = vmatpush1.msra.mxu0 %v153
    %581 = vmatprep.subr.mxu0 0.0
    %582 = vmatpush1.msra.mxu0 %v154
    %583 = vmatprep.subr.mxu0 0.0
    %584 = vmatpush1.msra.mxu0 %v155
    %585 = vmatprep.subr.mxu0 0.0
    %586 = vmatpush1.msra.mxu0 %v156
    %587 = vmatprep.subr.mxu0 0.0
    %588 = vmatpush1.msra.mxu0 0.0
    %589 = vmatprep.subr.mxu0 0.0
    %590 = vmatpush1.msra.mxu0 0.0
    %591 = vmatprep.subr.mxu0 0.0
    %592 = vmatpush1.msra.mxu0 0.0
    %593 = vmatprep.subr.mxu0 0.0
    %594 = vmatpush1.msra.mxu0 0.0
    %595 = vmatprep.subr.mxu0 0.0
    %596 = vmatpush1.msra.mxu0 0.0
    %597 = vmatprep.subr.mxu0 0.0
    %598 = vmatpush1.msra.mxu0 0.0
    %599 = vmatprep.subr.mxu0 0.0
    %600 = vmatpush1.msra.mxu0 0.0
    %601 = vmatprep.subr.mxu0 0.0
    %602 = vmatpush1.msra.mxu0 0.0
    %603 = vmatprep.subr.mxu0 0.0
    %604 = vmatpush1.msra.mxu0 0.0
    %605 = vmatprep.subr.mxu0 0.0
    %606 = vmatpush1.msra.mxu0 0.0
    %607 = vmatprep.subr.mxu0 0.0
    %608 = vmatpush1.msra.mxu0 0.0
    %609 = vmatprep.subr.mxu0 0.0
    %610 = vmatpush1.msra.mxu0 0.0
    %611 = vmatprep.subr.mxu0 0.0
    %612 = vmatpush1.msra.mxu0 0.0
    %613 = vmatprep.subr.mxu0 0.0
    %614 = vmatpush1.msra.mxu0 0.0
    %615 = vmatprep.subr.mxu0 0.0
    %616 = vmatpush1.msra.mxu0 0.0
    %617 = vmatprep.subr.mxu0 0.0
    %618 = vmatpush1.msra.mxu0 0.0
    %619 = vmatprep.subr.mxu0 0.0
    %620 = vmatpush1.msra.mxu0 0.0
    %621 = vmatprep.subr.mxu0 0.0
    %622 = vmatpush1.msra.mxu0 0.0
    %623 = vmatprep.subr.mxu0 0.0
    %624 = vmatpush1.msra.mxu0 0.0
    %625 = vmatprep.subr.mxu0 0.0
    %626 = vmatpush1.msra.mxu0 0.0
    %627 = vmatprep.subr.mxu0 0.0
    %628 = vmatpush1.msra.mxu0 0.0
    %629 = vmatprep.subr.mxu0 0.0
    %630 = vmatpush1.msra.mxu0 0.0
    %631 = vmatprep.subr.mxu0 0.0
    %632 = vmatpush1.msra.mxu0 0.0
    %633 = vmatprep.subr.mxu0 0.0
    %634 = vmatpush1.msra.mxu0 0.0
    %635 = vmatprep.subr.mxu0 0.0
    %636 = vmatpush1.msra.mxu0 0.0
    %637 = vmatprep.subr.mxu0 0.0
    %638 = vmatpush1.msra.mxu0 0.0
    %639 = vmatprep.subr.mxu0 0.0
    %640 = vmatpush1.msra.mxu0 0.0
    %641 = vmatprep.subr.mxu0 0.0
    %642 = vmatpush1.msra.mxu0 0.0
    %643 = vmatprep.mubr.f32.mxu0 0.0
    %644 = vmatmul.mubr.f32.gmra.mrb[0].mxu0 %v577
    %v645 = vpop.f32.mrb[0].mxu0
    %v646 = vadd.f32 0.0, %v645
    %v647 = vpop.f32.mrb[0].mxu0
    %648 = vdwg.mxu0
    %v649 = vadd.f32 %v576, %v646
    %v650 = vmul.f32 %v162, %v649
    %v651 = vtanh.pop %v650
    %v652 = vmul.f32 %v162, %v651
    %v653 = vadd.f32 %v652, %v163
    %v654 = vmul.f32 %v653, %v563
    %656 = vrot.lane.b32.xlu0 %v653, 64
    %v657 = vpop.permute.xlu0 %656
    %v659 = vmul.f32 %v653, %v657
    %661 = vrot.lane.b32.xlu0 %v659, 32
    %v662 = vpop.permute.xlu0 %661
    %v664 = vadd.f32 %v654, %v662
    %v665 = vtanh.pop %v664
    %667 = vrot.lane.b32.xlu0 %v665, 64
    %v668 = vpop.permute.xlu0 %667
    %v670 = vmul.f32 %v653, %v668
    %672 = vrot.lane.b32.xlu0 %v670, 32
    %v673 = vpop.permute.xlu0 %672
    %s675 = scalar_lea.vmem [#allocation8], 8
    %676 = vst.msk [vmem:[%s675] sm:$0x3] %vm271, %v673
    %v677 = vld [vmem:[#allocation2 + $0xa] sm:$0x3]
    %v678 = vsel %vm167, %v673, 0
    %680 = vmatprep.subr.mxu0 0.0
    %681 = vmatpush1.msra.mxu0 %v153
    %682 = vmatprep.subr.mxu0 0.0
    %683 = vmatpush1.msra.mxu0 %v154
    %684 = vmatprep.subr.mxu0 0.0
    %685 = vmatpush1.msra.mxu0 %v155
    %686 = vmatprep.subr.mxu0 0.0
    %687 = vmatpush1.msra.mxu0 %v156
    %688 = vmatprep.subr.mxu0 0.0
    %689 = vmatpush1.msra.mxu0 0.0
    %690 = vmatprep.subr.mxu0 0.0
    %691 = vmatpush1.msra.mxu0 0.0
    %692 = vmatprep.subr.mxu0 0.0
    %693 = vmatpush1.msra.mxu0 0.0
    %694 = vmatprep.subr.mxu0 0.0
    %695 = vmatpush1.msra.mxu0 0.0
    %696 = vmatprep.subr.mxu0 0.0
    %697 = vmatpush1.msra.mxu0 0.0
    %698 = vmatprep.subr.mxu0 0.0
    %699 = vmatpush1.msra.mxu0 0.0
    %700 = vmatprep.subr.mxu0 0.0
    %701 = vmatpush1.msra.mxu0 0.0
    %702 = vmatprep.subr.mxu0 0.0
    %703 = vmatpush1.msra.mxu0 0.0
    %704 = vmatprep.subr.mxu0 0.0
    %705 = vmatpush1.msra.mxu0 0.0
    %706 = vmatprep.subr.mxu0 0.0
    %707 = vmatpush1.msra.mxu0 0.0
    %708 = vmatprep.subr.mxu0 0.0
    %709 = vmatpush1.msra.mxu0 0.0
    %710 = vmatprep.subr.mxu0 0.0
    %711 = vmatpush1.msra.mxu0 0.0
    %712 = vmatprep.subr.mxu0 0.0
    %713 = vmatpush1.msra.mxu0 0.0
    %714 = vmatprep.subr.mxu0 0.0
    %715 = vmatpush1.msra.mxu0 0.0
    %716 = vmatprep.subr.mxu0 0.0
    %717 = vmatpush1.msra.mxu0 0.0
    %718 = vmatprep.subr.mxu0 0.0
    %719 = vmatpush1.msra.mxu0 0.0
    %720 = vmatprep.subr.mxu0 0.0
    %721 = vmatpush1.msra.mxu0 0.0
    %722 = vmatprep.subr.mxu0 0.0
    %723 = vmatpush1.msra.mxu0 0.0
    %724 = vmatprep.subr.mxu0 0.0
    %725 = vmatpush1.msra.mxu0 0.0
    %726 = vmatprep.subr.mxu0 0.0
    %727 = vmatpush1.msra.mxu0 0.0
    %728 = vmatprep.subr.mxu0 0.0
    %729 = vmatpush1.msra.mxu0 0.0
    %730 = vmatprep.subr.mxu0 0.0
    %731 = vmatpush1.msra.mxu0 0.0
    %732 = vmatprep.subr.mxu0 0.0
    %733 = vmatpush1.msra.mxu0 0.0
    %734 = vmatprep.subr.mxu0 0.0
    %735 = vmatpush1.msra.mxu0 0.0
    %736 = vmatprep.subr.mxu0 0.0
    %737 = vmatpush1.msra.mxu0 0.0
    %738 = vmatprep.subr.mxu0 0.0
    %739 = vmatpush1.msra.mxu0 0.0
    %740 = vmatprep.subr.mxu0 0.0
    %741 = vmatpush1.msra.mxu0 0.0
    %742 = vmatprep.subr.mxu0 0.0
    %743 = vmatpush1.msra.mxu0 0.0
    %744 = vmatprep.mubr.f32.mxu0 0.0
    %745 = vmatmul.mubr.f32.gmra.mrb[0].mxu0 %v678
    %v746 = vpop.f32.mrb[0].mxu0
    %v747 = vadd.f32 0.0, %v746
    %v748 = vpop.f32.mrb[0].mxu0
    %749 = vdwg.mxu0
    %v750 = vadd.f32 %v677, %v747
    %v751 = vmul.f32 %v162, %v750
    %v752 = vtanh.pop %v751
    %v753 = vmul.f32 %v162, %v752
    %v754 = vadd.f32 %v753, %v163
    %v755 = vmul.f32 %v754, %v664
    %757 = vrot.lane.b32.xlu0 %v754, 64
    %v758 = vpop.permute.xlu0 %757
    %v760 = vmul.f32 %v754, %v758
    %762 = vrot.lane.b32.xlu0 %v760, 32
    %v763 = vpop.permute.xlu0 %762
    %v765 = vadd.f32 %v755, %v763
    %v766 = vtanh.pop %v765
    %768 = vrot.lane.b32.xlu0 %v766, 64
    %v769 = vpop.permute.xlu0 %768
    %v771 = vmul.f32 %v754, %v769
    %773 = vrot.lane.b32.xlu0 %v771, 32
    %v774 = vpop.permute.xlu0 %773
    %s776 = scalar_lea.vmem [#allocation8], 10
    %777 = vst.msk [vmem:[%s776] sm:$0x3] %vm271, %v774
    %v778 = vld [vmem:[#allocation2 + $0xc] sm:$0x3]
    %v779 = vsel %vm167, %v774, 0
    %781 = vmatprep.subr.mxu0 0.0
    %782 = vmatpush1.msra.mxu0 %v153
    %783 = vmatprep.subr.mxu0 0.0
    %784 = vmatpush1.msra.mxu0 %v154
    %785 = vmatprep.subr.mxu0 0.0
    %786 = vmatpush1.msra.mxu0 %v155
    %787 = vmatprep.subr.mxu0 0.0
    %788 = vmatpush1.msra.mxu0 %v156
    %789 = vmatprep.subr.mxu0 0.0
    %790 = vmatpush1.msra.mxu0 0.0
    %791 = vmatprep.subr.mxu0 0.0
    %792 = vmatpush1.msra.mxu0 0.0
    %793 = vmatprep.subr.mxu0 0.0
    %794 = vmatpush1.msra.mxu0 0.0
    %795 = vmatprep.subr.mxu0 0.0
    %796 = vmatpush1.msra.mxu0 0.0
    %797 = vmatprep.subr.mxu0 0.0
    %798 = vmatpush1.msra.mxu0 0.0
    %799 = vmatprep.subr.mxu0 0.0
    %800 = vmatpush1.msra.mxu0 0.0
    %801 = vmatprep.subr.mxu0 0.0
    %802 = vmatpush1.msra.mxu0 0.0
    %803 = vmatprep.subr.mxu0 0.0
    %804 = vmatpush1.msra.mxu0 0.0
    %805 = vmatprep.subr.mxu0 0.0
    %806 = vmatpush1.msra.mxu0 0.0
    %807 = vmatprep.subr.mxu0 0.0
    %808 = vmatpush1.msra.mxu0 0.0
    %809 = vmatprep.subr.mxu0 0.0
    %810 = vmatpush1.msra.mxu0 0.0
    %811 = vmatprep.subr.mxu0 0.0
    %812 = vmatpush1.msra.mxu0 0.0
    %813 = vmatprep.subr.mxu0 0.0
    %814 = vmatpush1.msra.mxu0 0.0
    %815 = vmatprep.subr.mxu0 0.0
    %816 = vmatpush1.msra.mxu0 0.0
    %817 = vmatprep.subr.mxu0 0.0
    %818 = vmatpush1.msra.mxu0 0.0
    %819 = vmatprep.subr.mxu0 0.0
    %820 = vmatpush1.msra.mxu0 0.0
    %821 = vmatprep.subr.mxu0 0.0
    %822 = vmatpush1.msra.mxu0 0.0
    %823 = vmatprep.subr.mxu0 0.0
    %824 = vmatpush1.msra.mxu0 0.0
    %825 = vmatprep.subr.mxu0 0.0
    %826 = vmatpush1.msra.mxu0 0.0
    %827 = vmatprep.subr.mxu0 0.0
    %828 = vmatpush1.msra.mxu0 0.0
    %829 = vmatprep.subr.mxu0 0.0
    %830 = vmatpush1.msra.mxu0 0.0
    %831 = vmatprep.subr.mxu0 0.0
    %832 = vmatpush1.msra.mxu0 0.0
    %833 = vmatprep.subr.mxu0 0.0
    %834 = vmatpush1.msra.mxu0 0.0
    %835 = vmatprep.subr.mxu0 0.0
    %836 = vmatpush1.msra.mxu0 0.0
    %837 = vmatprep.subr.mxu0 0.0
    %838 = vmatpush1.msra.mxu0 0.0
    %839 = vmatprep.subr.mxu0 0.0
    %840 = vmatpush1.msra.mxu0 0.0
    %841 = vmatprep.subr.mxu0 0.0
    %842 = vmatpush1.msra.mxu0 0.0
    %843 = vmatprep.subr.mxu0 0.0
    %844 = vmatpush1.msra.mxu0 0.0
    %845 = vmatprep.mubr.f32.mxu0 0.0
    %846 = vmatmul.mubr.f32.gmra.mrb[0].mxu0 %v779
    %v847 = vpop.f32.mrb[0].mxu0
    %v848 = vadd.f32 0.0, %v847
    %v849 = vpop.f32.mrb[0].mxu0
    %850 = vdwg.mxu0
    %v851 = vadd.f32 %v778, %v848
    %v852 = vmul.f32 %v162, %v851
    %v853 = vtanh.pop %v852
    %v854 = vmul.f32 %v162, %v853
    %v855 = vadd.f32 %v854, %v163
    %v856 = vmul.f32 %v855, %v765
    %858 = vrot.lane.b32.xlu0 %v855, 64
    %v859 = vpop.permute.xlu0 %858
    %v861 = vmul.f32 %v855, %v859
    %863 = vrot.lane.b32.xlu0 %v861, 32
    %v864 = vpop.permute.xlu0 %863
    %v866 = vadd.f32 %v856, %v864
    %v867 = vtanh.pop %v866
    %869 = vrot.lane.b32.xlu0 %v867, 64
    %v870 = vpop.permute.xlu0 %869
    %v872 = vmul.f32 %v855, %v870
    %874 = vrot.lane.b32.xlu0 %v872, 32
    %v875 = vpop.permute.xlu0 %874
    %s877 = scalar_lea.vmem [#allocation8], 12
    %878 = vst.msk [vmem:[%s877] sm:$0x3] %vm271, %v875
    %v879 = vld [vmem:[#allocation2 + $0xe] sm:$0x3]
    %v880 = vsel %vm167, %v875, 0
    %882 = vmatprep.subr.mxu0 0.0
    %883 = vmatpush1.msra.mxu0 %v153
    %884 = vmatprep.subr.mxu0 0.0
    %885 = vmatpush1.msra.mxu0 %v154
    %886 = vmatprep.subr.mxu0 0.0
    %887 = vmatpush1.msra.mxu0 %v155
    %888 = vmatprep.subr.mxu0 0.0
    %889 = vmatpush1.msra.mxu0 %v156
    %890 = vmatprep.subr.mxu0 0.0
    %891 = vmatpush1.msra.mxu0 0.0
    %892 = vmatprep.subr.mxu0 0.0
    %893 = vmatpush1.msra.mxu0 0.0
    %894 = vmatprep.subr.mxu0 0.0
    %895 = vmatpush1.msra.mxu0 0.0
    %896 = vmatprep.subr.mxu0 0.0
    %897 = vmatpush1.msra.mxu0 0.0
    %898 = vmatprep.subr.mxu0 0.0
    %899 = vmatpush1.msra.mxu0 0.0
    %900 = vmatprep.subr.mxu0 0.0
    %901 = vmatpush1.msra.mxu0 0.0
    %902 = vmatprep.subr.mxu0 0.0
    %903 = vmatpush1.msra.mxu0 0.0
    %904 = vmatprep.subr.mxu0 0.0
    %905 = vmatpush1.msra.mxu0 0.0
    %906 = vmatprep.subr.mxu0 0.0
    %907 = vmatpush1.msra.mxu0 0.0
    %908 = vmatprep.subr.mxu0 0.0
    %909 = vmatpush1.msra.mxu0 0.0
    %910 = vmatprep.subr.mxu0 0.0
    %911 = vmatpush1.msra.mxu0 0.0
    %912 = vmatprep.subr.mxu0 0.0
    %913 = vmatpush1.msra.mxu0 0.0
    %914 = vmatprep.subr.mxu0 0.0
    %915 = vmatpush1.msra.mxu0 0.0
    %916 = vmatprep.subr.mxu0 0.0
    %917 = vmatpush1.msra.mxu0 0.0
    %918 = vmatprep.subr.mxu0 0.0
    %919 = vmatpush1.msra.mxu0 0.0
    %920 = vmatprep.subr.mxu0 0.0
    %921 = vmatpush1.msra.mxu0 0.0
    %922 = vmatprep.subr.mxu0 0.0
    %923 = vmatpush1.msra.mxu0 0.0
    %924 = vmatprep.subr.mxu0 0.0
    %925 = vmatpush1.msra.mxu0 0.0
    %926 = vmatprep.subr.mxu0 0.0
    %927 = vmatpush1.msra.mxu0 0.0
    %928 = vmatprep.subr.mxu0 0.0
    %929 = vmatpush1.msra.mxu0 0.0
    %930 = vmatprep.subr.mxu0 0.0
    %931 = vmatpush1.msra.mxu0 0.0
    %932 = vmatprep.subr.mxu0 0.0
    %933 = vmatpush1.msra.mxu0 0.0
    %934 = vmatprep.subr.mxu0 0.0
    %935 = vmatpush1.msra.mxu0 0.0
    %936 = vmatprep.subr.mxu0 0.0
    %937 = vmatpush1.msra.mxu0 0.0
    %938 = vmatprep.subr.mxu0 0.0
    %939 = vmatpush1.msra.mxu0 0.0
    %940 = vmatprep.subr.mxu0 0.0
    %941 = vmatpush1.msra.mxu0 0.0
    %942 = vmatprep.subr.mxu0 0.0
    %943 = vmatpush1.msra.mxu0 0.0
    %944 = vmatprep.subr.mxu0 0.0
    %945 = vmatpush1.msra.mxu0 0.0
    %946 = vmatprep.mubr.f32.mxu0 0.0
    %947 = vmatmul.mubr.f32.gmra.mrb[0].mxu0 %v880
    %v948 = vpop.f32.mrb[0].mxu0
    %v949 = vadd.f32 0.0, %v948
    %v950 = vpop.f32.mrb[0].mxu0
    %951 = vdwg.mxu0
    %v952 = vadd.f32 %v879, %v949
    %v953 = vmul.f32 %v162, %v952
    %v954 = vtanh.pop %v953
    %v955 = vmul.f32 %v162, %v954
    %v956 = vadd.f32 %v955, %v163
    %v957 = vmul.f32 %v956, %v866
    %959 = vrot.lane.b32.xlu0 %v956, 64
    %v960 = vpop.permute.xlu0 %959
    %v962 = vmul.f32 %v956, %v960
    %964 = vrot.lane.b32.xlu0 %v962, 32
    %v965 = vpop.permute.xlu0 %964
    %v967 = vadd.f32 %v957, %v965
    %v968 = vtanh.pop %v967
    %970 = vrot.lane.b32.xlu0 %v968, 64
    %v971 = vpop.permute.xlu0 %970
    %v973 = vmul.f32 %v956, %v971
    %975 = vrot.lane.b32.xlu0 %v973, 32
    %v976 = vpop.permute.xlu0 %975
    %s978 = scalar_lea.vmem [#allocation8], 14
    %979 = vst.msk [vmem:[%s978] sm:$0x3] %vm271, %v976
    %980 = vst.msk [vmem:[#allocation9] sm:$0x3] %vm271, %v976
    %982 = vrot.lane.b32.xlu0 %v967, 96
    %v983 = vpop.permute.xlu0 %982
    %985 = vst.msk [vmem:[#allocation11] sm:$0x3] %vm271, %v983
    // Predicated region
    $region34: #{decoder_rnn_forward.1} parent=1 // pred_check
      _
    $region35: #{decoder_rnn_forward.1} parent=1 // pred_check_branch
      %987 = sbr.rel (0) target = $region37
    $region36: #{decoder_rnn_forward.1} parent=1 // pred_region
      %s989 = ssub.s32 256, 256
      %990 = vsyncadd [#allocation5], %s989
      %s991 = sshll.u32 [#allocation8], 4
      %s992 = int_to_ptr.vmem [resolvable:$true] %s991
      %997 = dma.vmem_to_hbm [thread:$0]  %s992, 256, %s6, [#allocation5], 32, 32, 2
    $region37: #{decoder_rnn_forward.1} parent=1 // pred_fallthru
      _
    // Predicated region
    $region38: #{decoder_rnn_forward.1} parent=1 // pred_check
      _
    $region39: #{decoder_rnn_forward.1} parent=1 // pred_check_branch
      %999 = sbr.rel (0) target = $region41
    $region40: #{decoder_rnn_forward.1} parent=1 // pred_region
      %s1001 = ssub.s32 32, 32
      %1002 = vsyncadd [#allocation10], %s1001
      %s1004 = sshll.u32 [#allocation9], 4
      %s1005 = int_to_ptr.vmem [resolvable:$true] %s1004
      %1007 = dma.vmem_to_hbm [thread:$0]  %s1005, 32, %s7, [#allocation10]
    $region41: #{decoder_rnn_forward.1} parent=1 // pred_fallthru
      _
    // Predicated region
    $region42: #{decoder_rnn_forward.1} parent=1 // pred_check
      _
    $region43: #{decoder_rnn_forward.1} parent=1 // pred_check_branch
      %1009 = sbr.rel (0) target = $region45
    $region44: #{decoder_rnn_forward.1} parent=1 // pred_region
      %s1011 = ssub.s32 32, 32
      %1012 = vsyncadd [#allocation10], %s1011
      %s1014 = sshll.u32 [#allocation11], 4
      %s1015 = int_to_ptr.vmem [resolvable:$true] %s1014
      %1017 = dma.vmem_to_hbm [thread:$0]  %s1015, 32, %s8, [#allocation10]
    $region45: #{decoder_rnn_forward.1} parent=1 // pred_fallthru
      _
    // Predicated region
    $region46: #{decoder_rnn_forward.1} parent=1 // pred_check
      _
    $region47: #{decoder_rnn_forward.1} parent=1 // pred_check_branch
      %1019 = sbr.rel (0) target = $region49
    $region48: #{decoder_rnn_forward.1} parent=1 // pred_region
      %1020 = dma.done [#allocation5], 256
    $region49: #{decoder_rnn_forward.1} parent=1 // pred_fallthru
      _
    // Predicated region
    $region50: #{decoder_rnn_forward.1} parent=1 // pred_check
      _
    $region51: #{decoder_rnn_forward.1} parent=1 // pred_check_branch
      %1022 = sbr.rel (0) target = $region53
    $region52: #{decoder_rnn_forward.1} parent=1 // pred_region
      %1023 = dma.done [#allocation10], 32
    $region53: #{decoder_rnn_forward.1} parent=1 // pred_fallthru
      _
    // Predicated region
    $region54: #{decoder_rnn_forward.1} parent=1 // pred_check
      _
    $region55: #{decoder_rnn_forward.1} parent=1 // pred_check_branch
      %1025 = sbr.rel (0) target = $region57
    $region56: #{decoder_rnn_forward.1} parent=1 // pred_region
      %1026 = dma.done [#allocation10], 32
    $region57: #{decoder_rnn_forward.1} parent=1 // pred_fallthru
      _
    %1027 = vsyncpa [#allocation4], 1
    %1028 = vsyncpa [#allocation7], 1
    %1029 = vsyncpa [#allocation5], 1
    %1030 = vsyncpa [#allocation10], 1

</llo_original>
